<compile_context>
chip_gen: v6e
topology: v6e:2x2x1
jax: 0.10.0
libtpu: 0.0.40
codegen_flags: <defaults>
</compile_context>

<pallas_src>
import functools

import jax
import jax.numpy as jnp
from jax import lax
from jax.experimental import pallas as pl
from jax.experimental.pallas import tpu as pltpu

LANE = 128


def _tile_config():
    """Per-generation (rows_per_step upper bound, vmem_limit_bytes or None)."""
    try:
        kind = jax.devices()[0].device_kind.lower()
    except Exception:
        return 4096, None
    if "v6" in kind:
        # 8192x128 f32 = 4 MiB/tile; 2 inputs x 2 buffers = 16 MiB < 32 MiB default.
        return 8192, None
    if "7" in kind:
        # v7x: 16384x128 f32 = 8 MiB/tile; 32 MiB double-buffered -> raise scoped VMEM.
        return 16384, 40 * 1024 * 1024
    # v5e (16 MiB scoped default) and unknown chips: stay conservative.
    return 4096, None


def _hinge_poly_kernel(x_ref, y_ref, o_ref, *, degree, hinge,
                       needs_mask, valid_rows_last):
    rows, lanes = x_ref.shape

    # Cast in-kernel (HBM traffic stays at the input dtype's width).
    x = x_ref[...].astype(jnp.float32)
    y = y_ref[...].astype(jnp.float32)
    d = x - y

    deg_is_int = float(degree) == int(degree)
    if deg_is_int and int(degree) % 2 == 0 and float(hinge) >= 0.0:
        # Even integer degree: skip abs; compare squared values instead.
        d2 = d * d
        z = jnp.where(d2 < jnp.float32(float(hinge) * float(hinge)),
                      jnp.float32(0.0), d2)
        p = lax.integer_pow(z, int(degree) // 2)
    elif deg_is_int:
        z = jnp.abs(d)
        z = jnp.where(z < jnp.float32(hinge), jnp.float32(0.0), z)
        p = lax.integer_pow(z, int(degree))
    else:
        # TODO(synk): half-integer degrees could use integer_pow * sqrt instead of pow.
        z = jnp.abs(d)
        z = jnp.where(z < jnp.float32(hinge), jnp.float32(0.0), z)
        p = z ** jnp.float32(degree)

    if needs_mask:
        # Only the last grid step owns a partial block; every other step stays
        # on the bare hot loop.
        i = pl.program_id(0)
        last = pl.num_programs(0) - 1

        @pl.when(i != last)
        def _():
            o_ref[...] = jnp.sum(p, axis=0).reshape(1, 1, lanes)

        @pl.when(i == last)
        def _():
            # Block-local row mask against a static row count (no flat index).
            row = lax.broadcasted_iota(jnp.int32, (rows, lanes), 0)
            pm = jnp.where(row < valid_rows_last, p, jnp.float32(0.0))
            o_ref[...] = jnp.sum(pm, axis=0).reshape(1, 1, lanes)
    else:
        o_ref[...] = jnp.sum(p, axis=0).reshape(1, 1, lanes)


def hinge_poly_loss(x, y, degree=2, hinge=0.1):
    """Pallas TPU implementation of HingePolyLoss.forward."""
    assert x.shape == y.shape
    n_elems = x.size

    xf = jnp.ravel(x)
    yf = jnp.ravel(y)

    # 128-aligned prefix handled by the kernel; tiny (<128 elem) tail in JAX.
    n_main = (n_elems // LANE) * LANE
    rows = n_main // LANE

    tail_sum = None
    if n_main != n_elems:
        tx = xf[n_main:].astype(jnp.float32)
        ty = yf[n_main:].astype(jnp.float32)
        tz = jnp.abs(tx - ty)
        tz = jnp.where(tz < jnp.float32(hinge), jnp.float32(0.0), tz)
        if float(degree) == int(degree):
            tp = lax.integer_pow(tz, int(degree))
        else:
            tp = tz ** jnp.float32(degree)
        tail_sum = jnp.sum(tp)

    if rows == 0:
        # Input smaller than one lane-row: the tail path covered everything.
        return tail_sum / jnp.float32(n_elems)

    if n_main == n_elems:
        x2 = xf.reshape(rows, LANE)          # free row-major reshape, no copy
        y2 = yf.reshape(rows, LANE)
    else:
        x2 = xf[:n_main].reshape(rows, LANE)
        y2 = yf[:n_main].reshape(rows, LANE)

    max_rows, vmem_limit = _tile_config()
    rows_per_step = min(max_rows, rows)
    if rows > 8:
        # Keep >= 2 grid steps so the parallel axis can split across both v7x TCs.
        half = ((pl.cdiv(rows, 2) + 7) // 8) * 8
        rows_per_step = min(rows_per_step, half)
    grid_steps = pl.cdiv(rows, rows_per_step)

    needs_mask = (grid_steps * rows_per_step) != rows
    valid_rows_last = rows - (grid_steps - 1) * rows_per_step

    kernel = functools.partial(
        _hinge_poly_kernel,
        degree=degree,
        hinge=float(hinge),
        needs_mask=needs_mask,
        valid_rows_last=valid_rows_last,
    )

    cp_kwargs = dict(dimension_semantics=("parallel",))
    if vmem_limit is not None:
        cp_kwargs["vmem_limit_bytes"] = vmem_limit

    partials = pl.pallas_call(
        kernel,
        out_shape=jax.ShapeDtypeStruct((grid_steps, 1, LANE), jnp.float32),
        grid_spec=pltpu.PrefetchScalarGridSpec(
            num_scalar_prefetch=0,
            grid=(grid_steps,),
            in_specs=[
                pl.BlockSpec((rows_per_step, LANE), lambda i: (i, 0)),
                pl.BlockSpec((rows_per_step, LANE), lambda i: (i, 0)),
            ],
            out_specs=pl.BlockSpec((1, 1, LANE), lambda i: (i, 0, 0)),
        ),
        compiler_params=pltpu.CompilerParams(**cp_kwargs),
    )(x2, y2)

    total = jnp.sum(partials)
    if tail_sum is not None:
        total = total + tail_sum
    return total / jnp.float32(n_elems)


def _reference(x, y, degree=2, hinge=0.1):
    z = jnp.abs(x.astype(jnp.float32) - y.astype(jnp.float32))
    z = jnp.where(z < hinge, 0.0, z)
    return jnp.mean(z ** degree)


if __name__ == "__main__":
    key = jax.random.PRNGKey(0)
    kx, ky = jax.random.split(key)

    # Main test: shape implied by the module (batch=2, channels=4, 16x16 spatial).
    x = jax.random.normal(kx, (2, 4, 16, 16), dtype=jnp.float32)
    y = jax.random.normal(ky, (2, 4, 16, 16), dtype=jnp.float32)
    out = jax.block_until_ready(hinge_poly_loss(x, y, degree=2, hinge=0.1))
    ref = _reference(x, y, degree=2, hinge=0.1)
    assert jnp.allclose(out, ref, rtol=1e-5, atol=1e-6), (out, ref)

    # Ragged test: exercises the partial trailing block mask and the JAX tail path.
    kx2, ky2 = jax.random.split(jax.random.PRNGKey(0), 2)
    x2 = jax.random.normal(kx2, (3, 5, 7, 11), dtype=jnp.float32)
    y2 = jax.random.normal(ky2, (3, 5, 7, 11), dtype=jnp.float32)
    out2 = jax.block_until_ready(hinge_poly_loss(x2, y2, degree=3, hinge=0.2))
    ref2 = _reference(x2, y2, degree=3, hinge=0.2)
    assert jnp.allclose(out2, ref2, rtol=1e-5, atol=1e-6), (out2, ref2)

    print("KERNEL_OK")
</pallas_src>

<mosaic_0001>
module attributes {stable_mosaic.version = 11 : i64} {
  func.func @_hinge_poly_kernel(%arg0: i32, %arg1: memref<8x128xf32, #tpu.memory_space<vmem>>, %arg2: memref<8x128xf32, #tpu.memory_space<vmem>>, %arg3: memref<1x1x128xf32, #tpu.memory_space<vmem>>) attributes {dimension_semantics = [#tpu.dimension_semantics<parallel>], iteration_bounds = array<i64: 2>, scalar_prefetch = 0 : i64, scratch_operands = 0 : i64, tpu.core_type = #tpu.core_type<tc>, window_params = [{transform_indices = @transform_0, window_bounds = array<i64: 8, 128>}, {transform_indices = @transform_1, window_bounds = array<i64: 8, 128>}, {transform_indices = @transform_2, window_bounds = array<i64: 1, 1, 128>}]} {
    %c0 = arith.constant 0 : index
    %c0_0 = arith.constant 0 : index
    %0 = vector.load %arg1[%c0, %c0_0] : memref<8x128xf32, #tpu.memory_space<vmem>>, vector<8x128xf32>
    %c0_1 = arith.constant 0 : index
    %c0_2 = arith.constant 0 : index
    %1 = vector.load %arg2[%c0_1, %c0_2] : memref<8x128xf32, #tpu.memory_space<vmem>>, vector<8x128xf32>
    %2 = arith.subf %0, %1 : vector<8x128xf32>
    %3 = arith.mulf %2, %2 : vector<8x128xf32>
    %cst = arith.constant 0.00999999977 : f32
    %4 = vector.broadcast %cst : f32 to vector<8x128xf32>
    %5 = arith.cmpf olt, %3, %4 : vector<8x128xf32>
    %cst_3 = arith.constant 0.000000e+00 : f32
    %6 = vector.broadcast %cst_3 : f32 to vector<8x128xf32>
    %7 = arith.select %5, %6, %3 : vector<8x128xi1>, vector<8x128xf32>
    %cst_4 = arith.constant dense<0.000000e+00> : vector<128xf32>
    %8 = vector.multi_reduction <add>, %7, %cst_4 [0] : vector<8x128xf32> to vector<128xf32>
    %9 = vector.shape_cast %8 : vector<128xf32> to vector<1x1x128xf32>
    %c0_5 = arith.constant 0 : index
    %c0_6 = arith.constant 0 : index
    %c0_7 = arith.constant 0 : index
    %10 = vector.load %arg3[%c0_5, %c0_6, %c0_7] : memref<1x1x128xf32, #tpu.memory_space<vmem>>, vector<1x1x128xf32>
    tpu.vector_store %arg3[%c0_5, %c0_6, %c0_7], %9 {strides = array<i32>} : memref<1x1x128xf32, #tpu.memory_space<vmem>>, vector<1x1x128xf32>,
    return
  }
  func.func @transform_0(%arg0: i32) -> (i32, i32) {
    %c0_i32 = arith.constant 0 : i32
    %c0_i32_0 = arith.constant 0 : i32
    return %arg0, %c0_i32 : i32, i32
  }
  func.func @transform_1(%arg0: i32) -> (i32, i32) {
    %c0_i32 = arith.constant 0 : i32
    %c0_i32_0 = arith.constant 0 : i32
    return %arg0, %c0_i32 : i32, i32
  }
  func.func @transform_2(%arg0: i32) -> (i32, i32, i32) {
    %c0_i32 = arith.constant 0 : i32
    %c0_i32_0 = arith.constant 0 : i32
    %c0_i32_1 = arith.constant 0 : i32
    return %arg0, %c0_i32, %c0_i32_0 : i32, i32, i32
  }
}

</mosaic_0001>

<llo_original>
// kernel: tpu_custom_call.1
$region0: #{tpu_custom_call.1}
  #allocation0 [shape = 'u32[]', space=smem, size = 0x4, offset = 0x4, fixed_abs, tag = 'smem constant byte address 0x4 - core index']
  #allocation1 [shape = 'u32[144,128]{1,0:T(1,128)}', space=vmem, size = 0x12000, scoped, tag = 'internal scratch']
  %s0 = inlined_call_operand.hbm [shape: f32[16,128], index: 0, kind: input, shape index: {}]
  %s1 = inlined_call_operand.hbm [shape: f32[16,128], index: 1, kind: input, shape index: {}]
  %s2 = inlined_call_operand.hbm [shape: f32[2,1,128], index: 2, kind: output, shape index: {}]
  %s3 = sld [smem:[#allocation0]]
  $region49: #{tpu_custom_call.1} parent=0
    _
  %s5 = ssub.s32 1, %s3
  %s6 = scalar_select 0, %s5, %s3
  $region1: #{tpu_custom_call.1} parent=0
    #allocation2 [shape = 'u8[8192]{0}', space=vmem, size = 0x2000, scoped, tag = 'input window, operand 0']
    #allocation3 [shape = 's32[2]{0}', space=sflag, size = 0x8, scoped, tag = 'scoped memory for tpu_custom_call.1']
    #allocation4 [shape = 's32[2]{0}', space=sflag, size = 0x8, scoped, tag = 'scoped memory for tpu_custom_call.1']
    #allocation5 [shape = 'u8[8192]{0}', space=vmem, size = 0x2000, scoped, tag = 'input window, operand 1']
    #allocation6 [shape = 's32[2]{0}', space=sflag, size = 0x8, scoped, tag = 'scoped memory for tpu_custom_call.1']
    #allocation7 [shape = 'u8[1024]{0}', space=vmem, size = 0x400, scoped, tag = 'output window, operand 0']
    %7 = vsyncpa [#allocation3], 0
    %s8 = scalar_lea.sflag [#allocation3], 1
    %9 = vsyncpa %s8, 0
    %10 = vsyncpa [#allocation6], 0
    %s11 = scalar_lea.sflag [#allocation6], 1
    %12 = vsyncpa %s11, 0
    %13 = vsyncpa [#allocation4], 0
    %s14 = scalar_lea.sflag [#allocation4], 1
    %15 = vsyncpa %s14, 0
    loop: start=0, step=1, limit=4
    $region2: #{tpu_custom_call.1} parent=1 // loop_pre_header
      _
    $region3: #{tpu_custom_call.1} parent=1 // loop_header
      %s17 = sphi 0, %s21
      %p18 = scmp.ge.s32.totalorder %s17, 4
      %s27 = sphi 0, %s29
      %s30 = sphi 0, %s27
      %s31 = sphi 0, %s30
      %s47 = sphi 0, %s31
      %s53 = sphi 0, %s55
      %s56 = sphi 0, %s53
      %s57 = sphi 0, %s56
      %s73 = sphi 0, %s57
      %s79 = sphi 0, %s81
      %s82 = sphi 0, %s79
      %s83 = sphi 0, %s82
      %s99 = sphi 0, %s83
    $region4: #{tpu_custom_call.1} parent=1 // loop_header_branch
      %20 = sbr.rel (%p18) target = $region8
    $region5: #{tpu_custom_call.1} parent=1 // loop_body
      %s22 = ssub.s32 %s17, 1
      %s23 = ssub.s32 %s17, 2
      %s24 = sadd.s32 %s17, 1
      %s25 = ssub.s32 %s17, %s24
      %p26 = scmp.eq.s32.totalorder %s25, 0
      %s28 = sadd.s32 %s27, 1
      %s29 = scalar_select %p26, %s27, %s28
      %p32 = pneg %p26
      %p33 = scmp.eq.s32.totalorder %s17, 1
      %p34 = por %p32, %p33
      %p35 = scmp.ne.s32.totalorder %s27, %s30
      %p36 = scmp.eq.s32.totalorder %s17, 0
      %p37 = por %p35, %p36
      %p38 = scmp.ne.s32.totalorder %s27, %s30
      %p39 = scmp.eq.s32.totalorder %s22, 1
      %p40 = por %p38, %p39
      %p41 = scmp.ne.s32.totalorder %s30, %s31
      %p42 = scmp.eq.s32.totalorder %s22, 0
      %p43 = por %p41, %p42
      %p44 = scmp.ne.s32.totalorder %s30, %s31
      %p45 = scmp.eq.s32.totalorder %s23, 1
      %p46 = por %p44, %p45
      %p48 = scmp.ne.s32.totalorder %s31, %s47
      %p49 = scmp.eq.s32.totalorder %s23, 0
      %p50 = por %p48, %p49
      %s51 = ssub.s32 %s17, %s24
      %p52 = scmp.eq.s32.totalorder %s51, 0
      %s54 = sadd.s32 %s53, 1
      %s55 = scalar_select %p52, %s53, %s54
      %p58 = pneg %p52
      %p59 = scmp.eq.s32.totalorder %s17, 1
      %p60 = por %p58, %p59
      %p61 = scmp.ne.s32.totalorder %s53, %s56
      %p62 = scmp.eq.s32.totalorder %s17, 0
      %p63 = por %p61, %p62
      %p64 = scmp.ne.s32.totalorder %s53, %s56
      %p65 = scmp.eq.s32.totalorder %s22, 1
      %p66 = por %p64, %p65
      %p67 = scmp.ne.s32.totalorder %s56, %s57
      %p68 = scmp.eq.s32.totalorder %s22, 0
      %p69 = por %p67, %p68
      %p70 = scmp.ne.s32.totalorder %s56, %s57
      %p71 = scmp.eq.s32.totalorder %s23, 1
      %p72 = por %p70, %p71
      %p74 = scmp.ne.s32.totalorder %s57, %s73
      %p75 = scmp.eq.s32.totalorder %s23, 0
      %p76 = por %p74, %p75
      %s77 = ssub.s32 %s17, %s24
      %p78 = scmp.eq.s32.totalorder %s77, 0
      %s80 = sadd.s32 %s79, 1
      %s81 = scalar_select %p78, %s79, %s80
      %p84 = pneg %p78
      %p85 = scmp.eq.s32.totalorder %s17, 1
      %p86 = por %p84, %p85
      %p87 = scmp.ne.s32.totalorder %s79, %s82
      %p88 = scmp.eq.s32.totalorder %s17, 0
      %p89 = por %p87, %p88
      %p90 = scmp.ne.s32.totalorder %s79, %s82
      %p91 = scmp.eq.s32.totalorder %s22, 1
      %p92 = por %p90, %p91
      %p93 = scmp.ne.s32.totalorder %s82, %s83
      %p94 = scmp.eq.s32.totalorder %s22, 0
      %p95 = por %p93, %p94
      %p96 = scmp.ne.s32.totalorder %s82, %s83
      %p97 = scmp.eq.s32.totalorder %s23, 1
      %p98 = por %p96, %p97
      %p100 = scmp.ne.s32.totalorder %s83, %s99
      %p101 = scmp.eq.s32.totalorder %s23, 0
      %p102 = por %p100, %p101
      %p103 = scmp.le.s32.totalorder 1, %s17
      %p104 = scmp.lt.s32.totalorder %s17, 3
      %p105 = pnand %p103, %p104
      %p106 = pneg %p105
      // Predicated region
      $region9: #{tpu_custom_call.1} parent=5 // pred_check
        _
      $region10: #{tpu_custom_call.1} parent=5 // pred_check_branch
        %108 = sbr.rel (%p105) target = $region12
      $region11: #{tpu_custom_call.1} parent=5 // pred_region
        %s109 = ssub.s32 %s17, 1
      $region12: #{tpu_custom_call.1} parent=5 // pred_fallthru
        _
      %p110 = scmp.lt.s32.totalorder %s17, 2
      // Predicated region
      $region13: #{tpu_custom_call.1} parent=5 // pred_check
        %p111 = pneg %p110
      $region14: #{tpu_custom_call.1} parent=5 // pred_check_branch
        %113 = sbr.rel (%p111) target = $region16
      $region15: #{tpu_custom_call.1} parent=5 // pred_region
        // Predicated region
        $region17: #{tpu_custom_call.1} parent=15 // pred_check
          %p114 = pneg %p37
        $region18: #{tpu_custom_call.1} parent=15 // pred_check_branch
          %116 = sbr.rel (%p114) target = $region20
        $region19: #{tpu_custom_call.1} parent=15 // pred_region
          %s117 = sand.u32 %s27, 1
          %s118 = scalar_lea.sflag [#allocation3], %s117
          %s119 = sand.u32 %s27, 1
          %s120 = smul.addr %s119, 8
          %s121 = scalar_lea.vmem [#allocation2], %s120
          %s123 = ssub.s32 128, 128
          %124 = vsyncadd %s118, %s123
          %s125 = smul.addr %s17, 128
          %s126 = scalar_lea.hbm %s0, %s125
          %s128 = sshll.u32 %s121, 4
          %s129 = int_to_ptr.vmem [resolvable:$true] %s128
          %131 = dma.hbm_to_vmem [thread:$0]  %s126, 128, %s129, %s118
        $region20: #{tpu_custom_call.1} parent=15 // pred_fallthru
          _
        // Predicated region
        $region21: #{tpu_custom_call.1} parent=15 // pred_check
          %p132 = pneg %p63
        $region22: #{tpu_custom_call.1} parent=15 // pred_check_branch
          %134 = sbr.rel (%p132) target = $region24
        $region23: #{tpu_custom_call.1} parent=15 // pred_region
          %s135 = sand.u32 %s53, 1
          %s136 = scalar_lea.sflag [#allocation6], %s135
          %s137 = sand.u32 %s53, 1
          %s138 = smul.addr %s137, 8
          %s139 = scalar_lea.vmem [#allocation5], %s138
          %s141 = ssub.s32 128, 128
          %142 = vsyncadd %s136, %s141
          %s143 = smul.addr %s17, 128
          %s144 = scalar_lea.hbm %s1, %s143
          %s146 = sshll.u32 %s139, 4
          %s147 = int_to_ptr.vmem [resolvable:$true] %s146
          %149 = dma.hbm_to_vmem [thread:$0]  %s144, 128, %s147, %s136
        $region24: #{tpu_custom_call.1} parent=15 // pred_fallthru
          _
      $region16: #{tpu_custom_call.1} parent=5 // pred_fallthru
        _
      %p150 = scmp.le.s32.totalorder 1, %s17
      %p151 = scmp.lt.s32.totalorder %s17, 3
      %p152 = pnand %p150, %p151
      %p153 = pneg %p152
      // Predicated region
      $region25: #{tpu_custom_call.1} parent=5 // pred_check
        _
      $region26: #{tpu_custom_call.1} parent=5 // pred_check_branch
        %155 = sbr.rel (%p152) target = $region28
      $region27: #{tpu_custom_call.1} parent=5 // pred_region
        %s156 = ssub.s32 %s17, 1
        %s157 = sand.u32 %s30, 1
        %s158 = scalar_lea.sflag [#allocation3], %s157
        %s159 = sand.u32 %s30, 1
        %s160 = smul.addr %s159, 8
        %s161 = scalar_lea.vmem [#allocation2], %s160
        // Predicated region
        $region29: #{tpu_custom_call.1} parent=27 // pred_check
          %p162 = pneg %p43
        $region30: #{tpu_custom_call.1} parent=27 // pred_check_branch
          %164 = sbr.rel (%p162) target = $region32
        $region31: #{tpu_custom_call.1} parent=27 // pred_region
          %165 = dma.done %s158, 128
        $region32: #{tpu_custom_call.1} parent=27 // pred_fallthru
          _
        %s166 = sand.u32 %s56, 1
        %s167 = scalar_lea.sflag [#allocation6], %s166
        %s168 = sand.u32 %s56, 1
        %s169 = smul.addr %s168, 8
        %s170 = scalar_lea.vmem [#allocation5], %s169
        // Predicated region
        $region33: #{tpu_custom_call.1} parent=27 // pred_check
          %p171 = pneg %p69
        $region34: #{tpu_custom_call.1} parent=27 // pred_check_branch
          %173 = sbr.rel (%p171) target = $region36
        $region35: #{tpu_custom_call.1} parent=27 // pred_region
          %174 = dma.done %s167, 128
        $region36: #{tpu_custom_call.1} parent=27 // pred_fallthru
          _
        %s175 = sand.u32 %s30, 1
        %s176 = scalar_lea.sflag [#allocation3], %s175
        %s177 = sand.u32 %s30, 1
        %s178 = smul.addr %s177, 8
        %s179 = scalar_lea.vmem [#allocation2], %s178
        %p180 = pneg %p43
        %p181 = pneg %p40
        %s182 = sand.u32 %s56, 1
        %s183 = scalar_lea.sflag [#allocation6], %s182
        %s184 = sand.u32 %s56, 1
        %s185 = smul.addr %s184, 8
        %s186 = scalar_lea.vmem [#allocation5], %s185
        %p187 = pneg %p69
        %p188 = pneg %p66
        %p189 = pneg %p95
        %p190 = pneg %p92
        %s191 = sand.u32 %s82, 1
        %s192 = scalar_lea.sflag [#allocation4], %s191
        %s193 = sand.u32 %s82, 1
        %s194 = scalar_lea.vmem [#allocation7], %s193
        %v195 = vld [vmem:[%s161] sm:$0xff]
        %v196 = vld [vmem:[%s170] sm:$0xff]
        %v197 = vsub.f32 %v195, %v196
        %v198 = vmul.f32 %v197, %v197
        %vm199 = vcmp.lt.f32.partialorder %v198, 0.01
        %v200 = vsel %vm199, 0.0, %v198
        %v201 = vrot.slane %v200, 4
        %v202 = vadd.f32 %v200, %v201
        %v203 = vrot.slane %v202, 2
        %v204 = vadd.f32 %v202, %v203
        %v205 = vrot.slane %v204, 1
        %v206 = vadd.f32 %v204, %v205
        %207 = vst [vmem:[%s194] sm:$0x1] %v206
        %s208 = sand.u32 %s82, 1
        %s209 = scalar_lea.sflag [#allocation4], %s208
        %s210 = sand.u32 %s82, 1
        %s211 = scalar_lea.vmem [#allocation7], %s210
        // Predicated region
        $region37: #{tpu_custom_call.1} parent=27 // pred_check
          %p212 = pneg %p92
        $region38: #{tpu_custom_call.1} parent=27 // pred_check_branch
          %214 = sbr.rel (%p212) target = $region40
        $region39: #{tpu_custom_call.1} parent=27 // pred_region
          %s216 = ssub.s32 16, 16
          %217 = vsyncadd %s209, %s216
          %s218 = smul.addr %s22, 16
          %s219 = scalar_lea.hbm %s2, %s218
          %s221 = sshll.u32 %s211, 4
          %s222 = int_to_ptr.vmem [resolvable:$true] %s221
          %224 = dma.vmem_to_hbm [thread:$0]  %s222, 16, %s219, %s209
        $region40: #{tpu_custom_call.1} parent=27 // pred_fallthru
          _
      $region28: #{tpu_custom_call.1} parent=5 // pred_fallthru
        _
      %p225 = scmp.le.s32.totalorder 2, %s17
      // Predicated region
      $region41: #{tpu_custom_call.1} parent=5 // pred_check
        %p226 = pneg %p225
      $region42: #{tpu_custom_call.1} parent=5 // pred_check_branch
        %228 = sbr.rel (%p226) target = $region44
      $region43: #{tpu_custom_call.1} parent=5 // pred_region
        %s229 = ssub.s32 %s17, 2
        // Predicated region
        $region45: #{tpu_custom_call.1} parent=43 // pred_check
          %p230 = pneg %p98
        $region46: #{tpu_custom_call.1} parent=43 // pred_check_branch
          %232 = sbr.rel (%p230) target = $region48
        $region47: #{tpu_custom_call.1} parent=43 // pred_region
          %s233 = sand.u32 %s83, 1
          %s234 = scalar_lea.sflag [#allocation4], %s233
          %s235 = sand.u32 %s83, 1
          %s236 = scalar_lea.vmem [#allocation7], %s235
          %237 = dma.done %s234, 16
        $region48: #{tpu_custom_call.1} parent=43 // pred_fallthru
          _
      $region44: #{tpu_custom_call.1} parent=5 // pred_fallthru
        _
    $region6: #{tpu_custom_call.1} parent=1 // loop_footer
      %s21 = sadd.s32 1, %s17
    $region7: #{tpu_custom_call.1} parent=1 // loop_footer_branch
      %16 = sbr.rel target = $region3
    $region8: #{tpu_custom_call.1} parent=1 // loop_exit
      _
    %238 = vsyncpa [#allocation3], 1
    %s239 = scalar_lea.sflag [#allocation3], 1
    %240 = vsyncpa %s239, 1
    %241 = vsyncpa [#allocation6], 1
    %s242 = scalar_lea.sflag [#allocation6], 1
    %243 = vsyncpa %s242, 1
    %244 = vsyncpa [#allocation4], 1
    %s245 = scalar_lea.sflag [#allocation4], 1
    %246 = vsyncpa %s245, 1

</llo_original>
